<compile_context>
chip_gen: v6e
topology: v6e:2x2x1
jax: 0.10.0
libtpu: 0.0.40
codegen_flags: <defaults>
</compile_context>

<pallas_src>
import jax
import jax.numpy as jnp
import numpy as np
from jax.experimental import pallas as pl
from jax.experimental.pallas import tpu as pltpu


# ---------------------------------------------------------------------------
# Kernel
# ---------------------------------------------------------------------------
def _make_noise_filter_kernel(hp):
    """hp = per-branch hidden size padded to a sublane multiple (30 -> 32)."""

    def kernel(b2_ref,                        # SMEM (2,)  conv2 biases
               f2_ref, f3_ref, f4_ref,        # (C, tile) / (C, P3) / (C, P4)
               m2_ref, m3_ref,                # (P4, tile) / (P4, P3) resize
               w1_ref, bw_ref,                # (2hp, C) fused conv1, (2hp, 2)
               out2_ref, out3_ref):
        # Fused 1x1 conv (C -> hidden, BN scale pre-folded) for BOTH branches
        # applied to the coarse F_4 map: one MXU matmul with M = 2*hp rows.
        z4 = jnp.dot(w1_ref[...], f4_ref[...],
                     preferred_element_type=jnp.float32)          # (2hp, P4)
        bw = bw_ref[...]                                          # (2hp, 2)
        bias = bw[:, 0:1]                                         # (2hp, 1)
        w2v = bw[:, 1:2]                                          # (2hp, 1)

        def gate(z4_b, m, bias_b, w2_b, b2):
            # Bilinear upsample via the per-image resize matrix (column tile).
            z = jnp.dot(z4_b.astype(m.dtype), m,
                        preferred_element_type=jnp.float32)       # (hp, n)
            # Fused (eval-mode) BatchNorm shift + ReLU.
            z = jnp.maximum(z + bias_b, 0.0)
            # 1x1 conv (hidden -> 1) as VPU multiply + sublane reduce.
            y = jnp.sum(w2_b * z, axis=0, keepdims=True) + b2     # (1, n)
            return jax.nn.sigmoid(y)

        # Branch g2: gates the current lane tile of F_2.
        g2 = gate(z4[:hp], m2_ref[...], bias[:hp], w2v[:hp], b2_ref[0])
        out2_ref[...] = (f2_ref[...] * g2).astype(out2_ref.dtype)

        # Branch g3: the (smaller) F_3 map is resident across the lane-tile
        # axis; compute and write it once per batch index.
        @pl.when(pl.program_id(1) == 0)
        def _():
            g3 = gate(z4[hp:], m3_ref[...], bias[hp:], w2v[hp:], b2_ref[1])
            out3_ref[...] = (f3_ref[...] * g3).astype(out3_ref.dtype)

    return kernel


# ---------------------------------------------------------------------------
# Host-side constants (built once, outside the forward call)
# ---------------------------------------------------------------------------
def bilinear_resize_matrix(in_size, out_size):
    """Row-interp matrix R (out, in), PyTorch bilinear align_corners=False."""
    i = jnp.arange(out_size, dtype=jnp.float32)
    src = (i + 0.5) * (in_size / out_size) - 0.5
    src = jnp.maximum(src, 0.0)
    i0 = jnp.minimum(jnp.floor(src).astype(jnp.int32), in_size - 1)
    lam = src - i0.astype(jnp.float32)
    i1 = jnp.minimum(i0 + 1, in_size - 1)
    rows = jnp.arange(out_size)
    R = jnp.zeros((out_size, in_size), jnp.float32)
    R = R.at[rows, i0].add(1.0 - lam)
    R = R.at[rows, i1].add(lam)
    return R


def _fold_branch_params(params, hid_pad):
    """Fold BN scale into w1 and zero-pad the hidden dim to hid_pad."""
    w1, bn_scale, bn_bias, w2, b2 = params
    hid, C = w1.shape
    w1f = w1 * bn_scale.reshape(hid, 1)                           # fold BN scale
    w1p = jnp.zeros((hid_pad, C), jnp.float32).at[:hid].set(w1f)
    bp = jnp.zeros((hid_pad,), jnp.float32).at[:hid].set(bn_bias.reshape(hid))
    w2p = jnp.zeros((hid_pad,), jnp.float32).at[:hid].set(w2.reshape(hid))
    return w1p, bp, w2p, jnp.asarray(b2, jnp.float32).reshape(())


def precompute_noise_filter_constants(params_g2, params_g3, *, H2, W2, H3, W3,
                                      H4, W4, resize_dtype=jnp.float32):
    """Build folded weights + per-image resize matrices once (cache & reuse)."""
    hid = params_g2[0].shape[0]
    hid_pad = max(8, -(-hid // 8) * 8)                            # 30 -> 32

    w1g2, bg2, w2g2, b2g2 = _fold_branch_params(params_g2, hid_pad)
    w1g3, bg3, w2g3, b2g3 = _fold_branch_params(params_g3, hid_pad)

    w1_both = jnp.concatenate([w1g2, w1g3], axis=0)               # (2hp, C)
    bw_both = jnp.stack([jnp.concatenate([bg2, bg3]),
                         jnp.concatenate([w2g2, w2g3])], axis=1)  # (2hp, 2)
    b2_pair = jnp.stack([b2g2, b2g3])                             # (2,) -> SMEM

    # Per-image separable-kron resize matrices (no batch blow-up).
    m2 = jnp.kron(bilinear_resize_matrix(H4, H2),
                  bilinear_resize_matrix(W4, W2)).T.astype(resize_dtype)  # (P4, P2)
    m3 = jnp.kron(bilinear_resize_matrix(H4, H3),
                  bilinear_resize_matrix(W4, W3)).T.astype(resize_dtype)  # (P4, P3)

    return dict(hid_pad=hid_pad, w1=w1_both, bw=bw_both, b2=b2_pair,
                m2=m2, m3=m3)


# ---------------------------------------------------------------------------
# Forward wrapper
# ---------------------------------------------------------------------------
def noise_filter_forward(F_2, F_3, F_4, consts, *, lane_tile=128,
                         vmem_limit_bytes=32 * 1024 * 1024):
    B, C, H2, W2 = F_2.shape
    _, _, H3, W3 = F_3.shape
    _, _, H4, W4 = F_4.shape
    # PyTorch resizes to a square (F_x.shape[-1], F_x.shape[-1]) target; the
    # broadcasted gating multiply only works for square feature maps.
    assert H2 == W2 and H3 == W3
    P2, P3, P4 = H2 * W2, H3 * W3, H4 * W4
    hp = consts["hid_pad"]

    # Lane-tile the F_2 spatial axis (>=128 lanes => unmasked stores; raise
    # toward 512-2048 at realistic resolutions, sized against v7x's 64 MiB).
    if lane_tile % 128 != 0 or P2 % lane_tile != 0:
        lane_tile = P2
    n_tiles = P2 // lane_tile

    # Native layout kept: pure reshapes, no transposes (no extra HBM passes).
    f2 = F_2.reshape(B, C, P2)
    f3 = F_3.reshape(B, C, P3)
    f4 = F_4.reshape(B, C, P4)

    sq = pl.Squeezed()
    out2, out3 = pl.pallas_call(
        _make_noise_filter_kernel(hp),
        out_shape=(jax.ShapeDtypeStruct((B, C, P2), F_2.dtype),
                   jax.ShapeDtypeStruct((B, C, P3), F_3.dtype)),
        grid_spec=pltpu.PrefetchScalarGridSpec(
            num_scalar_prefetch=0,
            grid=(B, n_tiles),
            in_specs=[
                pl.BlockSpec(memory_space=pltpu.MemorySpace.SMEM),          # b2 pair
                pl.BlockSpec((sq, C, lane_tile), lambda b, t: (b, 0, t)),   # F_2 tile
                pl.BlockSpec((sq, C, P3), lambda b, t: (b, 0, 0)),          # F_3 (resident over t)
                pl.BlockSpec((sq, C, P4), lambda b, t: (b, 0, 0)),          # F_4 (resident over t)
                pl.BlockSpec((P4, lane_tile), lambda b, t: (0, t)),         # m2 column tile
                pl.BlockSpec((P4, P3), lambda b, t: (0, 0)),                # m3 (resident)
                pl.BlockSpec((2 * hp, C), lambda b, t: (0, 0)),             # fused conv1 weights
                pl.BlockSpec((2 * hp, 2), lambda b, t: (0, 0)),             # packed bias / w2
            ],
            out_specs=[
                pl.BlockSpec((sq, C, lane_tile), lambda b, t: (b, 0, t)),
                pl.BlockSpec((sq, C, P3), lambda b, t: (b, 0, 0)),
            ],
        ),
        compiler_params=pltpu.CompilerParams(
            dimension_semantics=("parallel", "arbitrary"),
            vmem_limit_bytes=vmem_limit_bytes),
    )(consts["b2"], f2, f3, f4, consts["m2"], consts["m3"],
      consts["w1"], consts["bw"])

    # Pure reshapes back to (B, C, H, W) - no transposes.
    return out2.reshape(B, C, H2, W2), out3.reshape(B, C, H3, W3)


# ---------------------------------------------------------------------------
# Pure-JAX reference (same math, no Pallas) for verification.
# ---------------------------------------------------------------------------
def reference_branch(F, F4, Rh, Rw, w1, bn_scale, bn_bias, w2, b2):
    heat = jnp.einsum('hk,bckl,wl->bchw', Rh, F4, Rw)
    z = jnp.einsum('oc,bchw->bohw', w1, heat)
    z = jnp.maximum(z * bn_scale.reshape(1, -1, 1, 1)
                    + bn_bias.reshape(1, -1, 1, 1), 0.0)
    y = jnp.einsum('ko,bohw->bkhw', w2, z) + b2.reshape(1, 1, 1, 1)
    return F * jax.nn.sigmoid(y)


def make_branch_params(key, num_channel, hidden):
    """Deterministic synthetic params for conv1x1 -> BN -> ReLU -> conv1x1."""
    k1, k2, k3, k4, k5, k6 = jax.random.split(key, 6)
    w1 = jax.random.normal(k1, (hidden, num_channel), jnp.float32) * 0.1
    b1 = jax.random.normal(k2, (hidden,), jnp.float32) * 0.1
    gamma = 1.0 + 0.1 * jax.random.normal(k3, (hidden,), jnp.float32)
    beta = 0.1 * jax.random.normal(k4, (hidden,), jnp.float32)
    running_mean = jnp.zeros((hidden,), jnp.float32)
    running_var = jnp.ones((hidden,), jnp.float32)
    eps = 1e-5
    # Fold conv1 bias + eval-mode BatchNorm into a single scale/shift.
    scale = gamma / jnp.sqrt(running_var + eps)
    bias = (b1 - running_mean) * scale + beta
    w2 = jax.random.normal(k5, (1, hidden), jnp.float32) * 0.1
    b2 = jax.random.normal(k6, (1, 1), jnp.float32) * 0.1
    return (w1, scale.reshape(hidden, 1), bias.reshape(hidden, 1), w2, b2)


if __name__ == "__main__":
    # resnet=False branch: num_channel=64, hidden=30
    B, C, hidden = 2, 64, 30
    H2, H3, H4 = 16, 8, 4

    key = jax.random.PRNGKey(0)
    kF2, kF3, kF4, kg2, kg3 = jax.random.split(key, 5)
    F_2 = jax.random.normal(kF2, (B, C, H2, H2), jnp.float32)
    F_3 = jax.random.normal(kF3, (B, C, H3, H3), jnp.float32)
    F_4 = jax.random.normal(kF4, (B, C, H4, H4), jnp.float32)

    params_g2 = make_branch_params(kg2, C, hidden)
    params_g3 = make_branch_params(kg3, C, hidden)

    # Folded weights and resize matrices are built ONCE, outside the forward.
    consts = precompute_noise_filter_constants(
        params_g2, params_g3, H2=H2, W2=H2, H3=H3, W3=H3, H4=H4, W4=H4)

    # lane_tile=128 -> 2 lane tiles for F_2 at this scale (exercises the
    # pipelined multi-tile path); F_3 is handled once per batch index.
    f_2, f_3 = noise_filter_forward(F_2, F_3, F_4, consts, lane_tile=128)
    jax.block_until_ready((f_2, f_3))

    # Verify against the pure-JAX reference.
    Rh2 = Rw2 = bilinear_resize_matrix(H4, H2)
    Rh3 = Rw3 = bilinear_resize_matrix(H4, H3)
    ref_2 = reference_branch(F_2, F_4, Rh2, Rw2, *params_g2)
    ref_3 = reference_branch(F_3, F_4, Rh3, Rw3, *params_g3)

    assert f_2.shape == F_2.shape and f_3.shape == F_3.shape
    np.testing.assert_allclose(np.asarray(f_2), np.asarray(ref_2),
                               rtol=1e-4, atol=1e-4)
    np.testing.assert_allclose(np.asarray(f_3), np.asarray(ref_3),
                               rtol=1e-4, atol=1e-4)
    print("KERNEL_OK")
</pallas_src>

<mosaic_0001>
module attributes {stable_mosaic.version = 11 : i64} {
  func.func @kernel(%arg0: i32, %arg1: i32, %arg2: memref<2xf32, #tpu.memory_space<smem>>, %arg3: memref<1x64x128xf32, #tpu.memory_space<vmem>>, %arg4: memref<1x64x64xf32, #tpu.memory_space<vmem>>, %arg5: memref<1x64x16xf32, #tpu.memory_space<vmem>>, %arg6: memref<16x128xf32, #tpu.memory_space<vmem>>, %arg7: memref<16x64xf32, #tpu.memory_space<vmem>>, %arg8: memref<64x64xf32, #tpu.memory_space<vmem>>, %arg9: memref<64x2xf32, #tpu.memory_space<vmem>>, %arg10: memref<1x64x128xf32, #tpu.memory_space<vmem>>, %arg11: memref<1x64x64xf32, #tpu.memory_space<vmem>>) attributes {dimension_semantics = [#tpu.dimension_semantics<parallel>, #tpu.dimension_semantics<arbitrary>], iteration_bounds = array<i64: 2, 2>, scalar_prefetch = 0 : i64, scratch_operands = 0 : i64, tpu.core_type = #tpu.core_type<tc>, window_params = [{transform_indices = @transform_0, window_bounds = array<i64: 2>}, {transform_indices = @transform_1, window_bounds = array<i64: 1, 64, 128>}, {transform_indices = @transform_2, window_bounds = array<i64: 1, 64, 64>}, {transform_indices = @transform_3, window_bounds = array<i64: 1, 64, 16>}, {transform_indices = @transform_4, window_bounds = array<i64: 16, 128>}, {pipeline_mode = #tpu.pipeline_mode<synchronous>, transform_indices = @transform_5, window_bounds = array<i64: 16, 64>}, {pipeline_mode = #tpu.pipeline_mode<synchronous>, transform_indices = @transform_6, window_bounds = array<i64: 64, 64>}, {pipeline_mode = #tpu.pipeline_mode<synchronous>, transform_indices = @transform_7, window_bounds = array<i64: 64, 2>}, {transform_indices = @transform_8, window_bounds = array<i64: 1, 64, 128>}, {transform_indices = @transform_9, window_bounds = array<i64: 1, 64, 64>}]} {
    %c0 = arith.constant 0 : index
    %c0_0 = arith.constant 0 : index
    %0 = vector.load %arg8[%c0, %c0_0] : memref<64x64xf32, #tpu.memory_space<vmem>>, vector<64x64xf32>
    %c0_1 = arith.constant 0 : index
    %c0_2 = arith.constant 0 : index
    %c0_3 = arith.constant 0 : index
    %1 = vector.load %arg5[%c0_1, %c0_2, %c0_3] : memref<1x64x16xf32, #tpu.memory_space<vmem>>, vector<1x64x16xf32>
    %2 = vector.shape_cast %1 : vector<1x64x16xf32> to vector<64x16xf32>
    %cst = arith.constant dense<0.000000e+00> : vector<64x16xf32>
    %3 = tpu.matmul %0, %2, %cst {dimension_numbers = #tpu.dot_dimension_numbers<[1], [0], [0], [1], [0, 0, 1, 1], [], []>} : vector<64x64xf32>, vector<64x16xf32>, vector<64x16xf32> -> vector<64x16xf32>
    %c0_4 = arith.constant 0 : index
    %c0_5 = arith.constant 0 : index
    %4 = vector.load %arg9[%c0_4, %c0_5] : memref<64x2xf32, #tpu.memory_space<vmem>>, vector<64x2xf32>
    %5 = vector.extract_strided_slice %4 {offsets = [0, 0], sizes = [64, 1], strides = [1, 1]} : vector<64x2xf32> to vector<64x1xf32>
    %6 = vector.extract_strided_slice %4 {offsets = [0, 1], sizes = [64, 1], strides = [1, 1]} : vector<64x2xf32> to vector<64x1xf32>
    %7 = vector.extract_strided_slice %3 {offsets = [0, 0], sizes = [32, 16], strides = [1, 1]} : vector<64x16xf32> to vector<32x16xf32>
    %c0_6 = arith.constant 0 : index
    %c0_7 = arith.constant 0 : index
    %8 = vector.load %arg6[%c0_6, %c0_7] : memref<16x128xf32, #tpu.memory_space<vmem>>, vector<16x128xf32>
    %9 = vector.extract_strided_slice %5 {offsets = [0, 0], sizes = [32, 1], strides = [1, 1]} : vector<64x1xf32> to vector<32x1xf32>
    %10 = vector.extract_strided_slice %6 {offsets = [0, 0], sizes = [32, 1], strides = [1, 1]} : vector<64x1xf32> to vector<32x1xf32>
    %c0_8 = arith.constant 0 : index
    %11 = memref.load %arg2[%c0_8] : memref<2xf32, #tpu.memory_space<smem>>
    %cst_9 = arith.constant dense<0.000000e+00> : vector<32x128xf32>
    %12 = tpu.matmul %7, %8, %cst_9 {dimension_numbers = #tpu.dot_dimension_numbers<[1], [0], [0], [1], [0, 0, 1, 1], [], []>} : vector<32x16xf32>, vector<16x128xf32>, vector<32x128xf32> -> vector<32x128xf32>
    %13 = vector.broadcast %9 : vector<32x1xf32> to vector<32x128xf32>
    %14 = arith.addf %12, %13 : vector<32x128xf32>
    %cst_10 = arith.constant 0.000000e+00 : f32
    %15 = vector.broadcast %cst_10 : f32 to vector<32x128xf32>
    %16 = arith.maximumf %14, %15 : vector<32x128xf32>
    %17 = vector.broadcast %10 : vector<32x1xf32> to vector<32x128xf32>
    %18 = arith.mulf %17, %16 : vector<32x128xf32>
    %cst_11 = arith.constant dense<0.000000e+00> : vector<128xf32>
    %19 = vector.multi_reduction <add>, %18, %cst_11 [0] : vector<32x128xf32> to vector<128xf32>
    %20 = vector.shape_cast %19 : vector<128xf32> to vector<1x128xf32>
    %21 = vector.broadcast %11 : f32 to vector<1x128xf32>
    %22 = arith.addf %20, %21 : vector<1x128xf32>
    %23 = arith.negf %22 : vector<1x128xf32>
    %24 = math.exp %23 : vector<1x128xf32>
    %cst_12 = arith.constant 1.000000e+00 : f32
    %25 = vector.broadcast %cst_12 : f32 to vector<1x128xf32>
    %26 = arith.addf %25, %24 : vector<1x128xf32>
    %27 = arith.divf %25, %26 : vector<1x128xf32>
    %c0_13 = arith.constant 0 : index
    %c0_14 = arith.constant 0 : index
    %c0_15 = arith.constant 0 : index
    %28 = vector.load %arg3[%c0_13, %c0_14, %c0_15] : memref<1x64x128xf32, #tpu.memory_space<vmem>>, vector<1x64x128xf32>
    %29 = vector.shape_cast %28 : vector<1x64x128xf32> to vector<64x128xf32>
    %30 = vector.broadcast %27 : vector<1x128xf32> to vector<64x128xf32>
    %31 = arith.mulf %29, %30 : vector<64x128xf32>
    %c0_16 = arith.constant 0 : index
    %c0_17 = arith.constant 0 : index
    %c0_18 = arith.constant 0 : index
    %32 = vector.load %arg10[%c0_16, %c0_17, %c0_18] : memref<1x64x128xf32, #tpu.memory_space<vmem>>, vector<1x64x128xf32>
    %33 = vector.shape_cast %32 : vector<1x64x128xf32> to vector<64x128xf32>
    %34 = vector.shape_cast %31 : vector<64x128xf32> to vector<1x64x128xf32>
    tpu.vector_store %arg10[%c0_16, %c0_17, %c0_18], %34 {strides = array<i32>} : memref<1x64x128xf32, #tpu.memory_space<vmem>>, vector<1x64x128xf32>,
    %c0_i32 = arith.constant 0 : i32
    %35 = arith.cmpi eq, %arg1, %c0_i32 : i32
    %36 = arith.extui %35 : i1 to i32
    %c0_i32_19 = arith.constant 0 : i32
    %37 = arith.cmpi ne, %36, %c0_i32_19 : i32
    scf.if %37 {
      %38 = vector.extract_strided_slice %3 {offsets = [32, 0], sizes = [32, 16], strides = [1, 1]} : vector<64x16xf32> to vector<32x16xf32>
      %c0_20 = arith.constant 0 : index
      %c0_21 = arith.constant 0 : index
      %39 = vector.load %arg7[%c0_20, %c0_21] : memref<16x64xf32, #tpu.memory_space<vmem>>, vector<16x64xf32>
      %40 = vector.extract_strided_slice %5 {offsets = [32, 0], sizes = [32, 1], strides = [1, 1]} : vector<64x1xf32> to vector<32x1xf32>
      %41 = vector.extract_strided_slice %6 {offsets = [32, 0], sizes = [32, 1], strides = [1, 1]} : vector<64x1xf32> to vector<32x1xf32>
      %c1 = arith.constant 1 : index
      %42 = memref.load %arg2[%c1] : memref<2xf32, #tpu.memory_space<smem>>
      %cst_22 = arith.constant dense<0.000000e+00> : vector<32x64xf32>
      %43 = tpu.matmul %38, %39, %cst_22 {dimension_numbers = #tpu.dot_dimension_numbers<[1], [0], [0], [1], [0, 0, 1, 1], [], []>} : vector<32x16xf32>, vector<16x64xf32>, vector<32x64xf32> -> vector<32x64xf32>
      %44 = vector.broadcast %40 : vector<32x1xf32> to vector<32x64xf32>
      %45 = arith.addf %43, %44 : vector<32x64xf32>
      %cst_23 = arith.constant 0.000000e+00 : f32
      %46 = vector.broadcast %cst_23 : f32 to vector<32x64xf32>
      %47 = arith.maximumf %45, %46 : vector<32x64xf32>
      %48 = vector.broadcast %41 : vector<32x1xf32> to vector<32x64xf32>
      %49 = arith.mulf %48, %47 : vector<32x64xf32>
      %cst_24 = arith.constant dense<0.000000e+00> : vector<64xf32>
      %50 = vector.multi_reduction <add>, %49, %cst_24 [0] : vector<32x64xf32> to vector<64xf32>
      %51 = vector.shape_cast %50 : vector<64xf32> to vector<1x64xf32>
      %52 = vector.broadcast %42 : f32 to vector<1x64xf32>
      %53 = arith.addf %51, %52 : vector<1x64xf32>
      %54 = arith.negf %53 : vector<1x64xf32>
      %55 = math.exp %54 : vector<1x64xf32>
      %cst_25 = arith.constant 1.000000e+00 : f32
      %56 = vector.broadcast %cst_25 : f32 to vector<1x64xf32>
      %57 = arith.addf %56, %55 : vector<1x64xf32>
      %58 = arith.divf %56, %57 : vector<1x64xf32>
      %c0_26 = arith.constant 0 : index
      %c0_27 = arith.constant 0 : index
      %c0_28 = arith.constant 0 : index
      %59 = vector.load %arg4[%c0_26, %c0_27, %c0_28] : memref<1x64x64xf32, #tpu.memory_space<vmem>>, vector<1x64x64xf32>
      %60 = vector.shape_cast %59 : vector<1x64x64xf32> to vector<64x64xf32>
      %61 = vector.broadcast %58 : vector<1x64xf32> to vector<64x64xf32>
      %62 = arith.mulf %60, %61 : vector<64x64xf32>
      %c0_29 = arith.constant 0 : index
      %c0_30 = arith.constant 0 : index
      %c0_31 = arith.constant 0 : index
      %63 = vector.load %arg11[%c0_29, %c0_30, %c0_31] : memref<1x64x64xf32, #tpu.memory_space<vmem>>, vector<1x64x64xf32>
      %64 = vector.shape_cast %63 : vector<1x64x64xf32> to vector<64x64xf32>
      %65 = vector.shape_cast %62 : vector<64x64xf32> to vector<1x64x64xf32>
      tpu.vector_store %arg11[%c0_29, %c0_30, %c0_31], %65 {strides = array<i32>} : memref<1x64x64xf32, #tpu.memory_space<vmem>>, vector<1x64x64xf32>,
    } else {
    }
    return
  }
  func.func @transform_0(%arg0: i32, %arg1: i32) -> i32 {
    %c0_i32 = arith.constant 0 : i32
    %c0_i32_0 = arith.constant 0 : i32
    return %c0_i32 : i32
  }
  func.func @transform_1(%arg0: i32, %arg1: i32) -> (i32, i32, i32) {
    %c0_i32 = arith.constant 0 : i32
    %c0_i32_0 = arith.constant 0 : i32
    return %arg0, %c0_i32, %arg1 : i32, i32, i32
  }
  func.func @transform_2(%arg0: i32, %arg1: i32) -> (i32, i32, i32) {
    %c0_i32 = arith.constant 0 : i32
    %c0_i32_0 = arith.constant 0 : i32
    %c0_i32_1 = arith.constant 0 : i32
    return %arg0, %c0_i32, %c0_i32_0 : i32, i32, i32
  }
  func.func @transform_3(%arg0: i32, %arg1: i32) -> (i32, i32, i32) {
    %c0_i32 = arith.constant 0 : i32
    %c0_i32_0 = arith.constant 0 : i32
    %c0_i32_1 = arith.constant 0 : i32
    return %arg0, %c0_i32, %c0_i32_0 : i32, i32, i32
  }
  func.func @transform_4(%arg0: i32, %arg1: i32) -> (i32, i32) {
    %c0_i32 = arith.constant 0 : i32
    %c0_i32_0 = arith.constant 0 : i32
    return %c0_i32, %arg1 : i32, i32
  }
  func.func @transform_5(%arg0: i32, %arg1: i32) -> (i32, i32) {
    %c0_i32 = arith.constant 0 : i32
    %c0_i32_0 = arith.constant 0 : i32
    %c0_i32_1 = arith.constant 0 : i32
    return %c0_i32, %c0_i32_0 : i32, i32
  }
  func.func @transform_6(%arg0: i32, %arg1: i32) -> (i32, i32) {
    %c0_i32 = arith.constant 0 : i32
    %c0_i32_0 = arith.constant 0 : i32
    %c0_i32_1 = arith.constant 0 : i32
    return %c0_i32, %c0_i32_0 : i32, i32
  }
  func.func @transform_7(%arg0: i32, %arg1: i32) -> (i32, i32) {
    %c0_i32 = arith.constant 0 : i32
    %c0_i32_0 = arith.constant 0 : i32
    %c0_i32_1 = arith.constant 0 : i32
    return %c0_i32, %c0_i32_0 : i32, i32
  }
  func.func @transform_8(%arg0: i32, %arg1: i32) -> (i32, i32, i32) {
    %c0_i32 = arith.constant 0 : i32
    %c0_i32_0 = arith.constant 0 : i32
    return %arg0, %c0_i32, %arg1 : i32, i32, i32
  }
  func.func @transform_9(%arg0: i32, %arg1: i32) -> (i32, i32, i32) {
    %c0_i32 = arith.constant 0 : i32
    %c0_i32_0 = arith.constant 0 : i32
    %c0_i32_1 = arith.constant 0 : i32
    return %arg0, %c0_i32, %c0_i32_0 : i32, i32, i32
  }
}

</mosaic_0001>

<llo_original>
// kernel: tpu_custom_call.1
$region0: #{tpu_custom_call.1}
  #allocation0 [shape = 'u32[]', space=smem, size = 0x4, offset = 0x4, fixed_abs, tag = 'smem constant byte address 0x4 - core index']
  #allocation1 [shape = 'u32[144,128]{1,0:T(1,128)}', space=vmem, size = 0x12000, scoped, tag = 'internal scratch']
  %s0 = inlined_call_operand.vmem [shape: f32[2], index: 0, kind: input, shape index: {}]
  %s1 = inlined_call_operand.hbm [shape: f32[2,64,256], index: 1, kind: input, shape index: {}]
  %s2 = inlined_call_operand.vmem [shape: f32[2,64,64], index: 2, kind: input, shape index: {}]
  %s3 = inlined_call_operand.vmem [shape: f32[2,64,16], index: 3, kind: input, shape index: {}]
  %s4 = inlined_call_operand.hbm [shape: f32[16,256], index: 4, kind: input, shape index: {}]
  %s5 = inlined_call_operand.hbm [shape: f32[16,64], index: 5, kind: input, shape index: {}]
  %s6 = inlined_call_operand.vmem [shape: f32[64,64], index: 6, kind: input, shape index: {}]
  %s7 = inlined_call_operand.vmem [shape: f32[64,2], index: 7, kind: input, shape index: {}]
  %s8 = inlined_call_operand.hbm [shape: f32[2,64,256], index: 8, kind: output, shape index: {0}]
  %s9 = inlined_call_operand.hbm [shape: f32[2,64,64], index: 9, kind: output, shape index: {1}]
  %10 = xla_tuple %s8, %s9
  %s11 = sld [smem:[#allocation0]]
  $region93: #{tpu_custom_call.1} parent=0
    _
  %s13 = ssub.s32 1, %s11
  %s14 = scalar_select 0, %s13, %s11
  $region1: #{tpu_custom_call.1} parent=0
    #allocation2 [shape = 'u8[512]{0}', space=smem, size = 0x200, scoped, tag = 'input window, operand 0, single buffered']
    #allocation3 [shape = 's32[2]{0}', space=sflag, size = 0x8, scoped, tag = 'scoped memory for tpu_custom_call.1']
    #allocation4 [shape = 's32[2]{0}', space=sflag, size = 0x8, scoped, tag = 'scoped memory for tpu_custom_call.1']
    #allocation5 [shape = 's32[2]{0}', space=sflag, size = 0x8, scoped, tag = 'scoped memory for tpu_custom_call.1']
    #allocation6 [shape = 'u8[65536]{0}', space=vmem, size = 0x10000, scoped, tag = 'input window, operand 1']
    #allocation7 [shape = 'u8[16384]{0}', space=vmem, size = 0x4000, scoped, tag = 'input window, operand 4']
    #allocation8 [shape = 's32[2]{0}', space=sflag, size = 0x8, scoped, tag = 'scoped memory for tpu_custom_call.1']
    #allocation9 [shape = 'u8[8192]{0}', space=vmem, size = 0x2000, scoped, tag = 'input window, operand 5, single buffered']
    #allocation10 [shape = 'u8[65536]{0}', space=vmem, size = 0x10000, scoped, tag = 'output window, operand 0']
    #allocation11 [shape = 'u8[65536]{0}', space=vmem, size = 0x10000, scoped, tag = 'output window, operand 1']
    #allocation12 [shape = 's32[2]{0}', space=sflag, size = 0x8, scoped, tag = 'scoped memory for tpu_custom_call.1']
    %15 = vsyncpa [#allocation5], 0
    %16 = vsyncpa [#allocation3], 0
    %s17 = scalar_lea.sflag [#allocation3], 1
    %18 = vsyncpa %s17, 0
    %19 = vsyncpa [#allocation8], 0
    %s20 = scalar_lea.sflag [#allocation8], 1
    %21 = vsyncpa %s20, 0
    %22 = vsyncpa [#allocation4], 0
    %s23 = scalar_lea.sflag [#allocation4], 1
    %24 = vsyncpa %s23, 0
    %25 = vsyncpa [#allocation12], 0
    %s26 = scalar_lea.sflag [#allocation12], 1
    %27 = vsyncpa %s26, 0
    loop: start=0, step=1, limit=6
    $region2: #{tpu_custom_call.1} parent=1 // loop_pre_header
      _
    $region3: #{tpu_custom_call.1} parent=1 // loop_header
      %s29 = sphi 0, %s33
      %p30 = scmp.ge.s32.totalorder %s29, 6
      %s36 = sphi 0, %s48
      %s37 = sphi 0, %s44
      %s38 = sphi 0, %s36
      %s39 = sphi 0, %s37
      %s40 = sphi 0, %s38
      %s41 = sphi 0, %s39
      %s49 = sphi 0, %s49
      %s51 = sphi 0, %s49
      %s52 = sphi 0, %s51
      %s66 = sphi 0, %s52
      %s74 = sphi 0, %s76
      %s77 = sphi 0, %s74
      %s78 = sphi 0, %s77
      %s94 = sphi 0, %s78
      %s100 = sphi 0, %s102
      %s103 = sphi 0, %s100
      %s104 = sphi 0, %s103
      %s120 = sphi 0, %s104
      %s126 = sphi 0, %s128
      %s129 = sphi 0, %s126
      %s130 = sphi 0, %s129
      %s146 = sphi 0, %s130
      %s152 = sphi 0, %s154
      %s155 = sphi 0, %s152
      %s156 = sphi 0, %s155
      %s172 = sphi 0, %s156
      %s176 = sphi 0, %s176
      %s178 = sphi 0, %s176
      %s179 = sphi 0, %s178
      %s193 = sphi 0, %s179
      %s197 = sphi 0, %s197
      %s199 = sphi 0, %s197
      %s200 = sphi 0, %s199
      %s214 = sphi 0, %s200
      %s218 = sphi 0, %s218
      %s220 = sphi 0, %s218
      %s221 = sphi 0, %s220
      %s235 = sphi 0, %s221
      %s243 = sphi 0, %s245
      %s246 = sphi 0, %s243
      %s247 = sphi 0, %s246
      %s263 = sphi 0, %s247
      %s269 = sphi 0, %s271
      %s272 = sphi 0, %s269
      %s273 = sphi 0, %s272
      %s289 = sphi 0, %s273
    $region4: #{tpu_custom_call.1} parent=1 // loop_header_branch
      %32 = sbr.rel (%p30) target = $region8
    $region5: #{tpu_custom_call.1} parent=1 // loop_body
      %s34 = ssub.s32 %s29, 1
      %s35 = ssub.s32 %s29, 2
      %s42 = sadd.s32 1, %s37
      %p43 = scmp.ge.s32.totalorder %s42, 2
      %s44 = scalar_select %p43, 0, %s42
      %s45 = sadd.s32 1, %s36
      %s46 = scalar_select %p43, %s45, %s36
      %p47 = scmp.ge.s32.totalorder %s46, 2
      %s48 = scalar_select %p47, 0, %s46
      %s50 = sadd.s32 %s49, 1
      %p53 = scmp.eq.s32.totalorder %s29, 3
      %p54 = scmp.ne.s32.totalorder %s49, %s51
      %p55 = scmp.eq.s32.totalorder %s29, 0
      %p56 = por %p54, %p55
      %p57 = scmp.ne.s32.totalorder %s49, %s51
      %p58 = scmp.eq.s32.totalorder %s34, 3
      %p59 = por %p57, %p58
      %p60 = scmp.ne.s32.totalorder %s51, %s52
      %p61 = scmp.eq.s32.totalorder %s34, 0
      %p62 = por %p60, %p61
      %p63 = scmp.ne.s32.totalorder %s51, %s52
      %p64 = scmp.eq.s32.totalorder %s35, 3
      %p65 = por %p63, %p64
      %p67 = scmp.ne.s32.totalorder %s52, %s66
      %p68 = scmp.eq.s32.totalorder %s35, 0
      %p69 = por %p67, %p68
      %s70 = ssub.s32 %s36, %s48
      %s71 = ssub.s32 %s37, %s44
      %s72 = sor.u32 %s70, %s71
      %p73 = scmp.eq.s32.totalorder %s72, 0
      %s75 = sadd.s32 %s74, 1
      %s76 = scalar_select %p73, %s74, %s75
      %p79 = pneg %p73
      %p80 = scmp.eq.s32.totalorder %s29, 3
      %p81 = por %p79, %p80
      %p82 = scmp.ne.s32.totalorder %s74, %s77
      %p83 = scmp.eq.s32.totalorder %s29, 0
      %p84 = por %p82, %p83
      %p85 = scmp.ne.s32.totalorder %s74, %s77
      %p86 = scmp.eq.s32.totalorder %s34, 3
      %p87 = por %p85, %p86
      %p88 = scmp.ne.s32.totalorder %s77, %s78
      %p89 = scmp.eq.s32.totalorder %s34, 0
      %p90 = por %p88, %p89
      %p91 = scmp.ne.s32.totalorder %s77, %s78
      %p92 = scmp.eq.s32.totalorder %s35, 3
      %p93 = por %p91, %p92
      %p95 = scmp.ne.s32.totalorder %s78, %s94
      %p96 = scmp.eq.s32.totalorder %s35, 0
      %p97 = por %p95, %p96
      %s98 = ssub.s32 %s36, %s48
      %p99 = scmp.eq.s32.totalorder %s98, 0
      %s101 = sadd.s32 %s100, 1
      %s102 = scalar_select %p99, %s100, %s101
      %p105 = pneg %p99
      %p106 = scmp.eq.s32.totalorder %s29, 3
      %p107 = por %p105, %p106
      %p108 = scmp.ne.s32.totalorder %s100, %s103
      %p109 = scmp.eq.s32.totalorder %s29, 0
      %p110 = por %p108, %p109
      %p111 = scmp.ne.s32.totalorder %s100, %s103
      %p112 = scmp.eq.s32.totalorder %s34, 3
      %p113 = por %p111, %p112
      %p114 = scmp.ne.s32.totalorder %s103, %s104
      %p115 = scmp.eq.s32.totalorder %s34, 0
      %p116 = por %p114, %p115
      %p117 = scmp.ne.s32.totalorder %s103, %s104
      %p118 = scmp.eq.s32.totalorder %s35, 3
      %p119 = por %p117, %p118
      %p121 = scmp.ne.s32.totalorder %s104, %s120
      %p122 = scmp.eq.s32.totalorder %s35, 0
      %p123 = por %p121, %p122
      %s124 = ssub.s32 %s36, %s48
      %p125 = scmp.eq.s32.totalorder %s124, 0
      %s127 = sadd.s32 %s126, 1
      %s128 = scalar_select %p125, %s126, %s127
      %p131 = pneg %p125
      %p132 = scmp.eq.s32.totalorder %s29, 3
      %p133 = por %p131, %p132
      %p134 = scmp.ne.s32.totalorder %s126, %s129
      %p135 = scmp.eq.s32.totalorder %s29, 0
      %p136 = por %p134, %p135
      %p137 = scmp.ne.s32.totalorder %s126, %s129
      %p138 = scmp.eq.s32.totalorder %s34, 3
      %p139 = por %p137, %p138
      %p140 = scmp.ne.s32.totalorder %s129, %s130
      %p141 = scmp.eq.s32.totalorder %s34, 0
      %p142 = por %p140, %p141
      %p143 = scmp.ne.s32.totalorder %s129, %s130
      %p144 = scmp.eq.s32.totalorder %s35, 3
      %p145 = por %p143, %p144
      %p147 = scmp.ne.s32.totalorder %s130, %s146
      %p148 = scmp.eq.s32.totalorder %s35, 0
      %p149 = por %p147, %p148
      %s150 = ssub.s32 %s37, %s44
      %p151 = scmp.eq.s32.totalorder %s150, 0
      %s153 = sadd.s32 %s152, 1
      %s154 = scalar_select %p151, %s152, %s153
      %p157 = pneg %p151
      %p158 = scmp.eq.s32.totalorder %s29, 3
      %p159 = por %p157, %p158
      %p160 = scmp.ne.s32.totalorder %s152, %s155
      %p161 = scmp.eq.s32.totalorder %s29, 0
      %p162 = por %p160, %p161
      %p163 = scmp.ne.s32.totalorder %s152, %s155
      %p164 = scmp.eq.s32.totalorder %s34, 3
      %p165 = por %p163, %p164
      %p166 = scmp.ne.s32.totalorder %s155, %s156
      %p167 = scmp.eq.s32.totalorder %s34, 0
      %p168 = por %p166, %p167
      %p169 = scmp.ne.s32.totalorder %s155, %s156
      %p170 = scmp.eq.s32.totalorder %s35, 3
      %p171 = por %p169, %p170
      %p173 = scmp.ne.s32.totalorder %s156, %s172
      %p174 = scmp.eq.s32.totalorder %s35, 0
      %p175 = por %p173, %p174
      %s177 = sadd.s32 %s176, 1
      %p180 = scmp.eq.s32.totalorder %s29, 3
      %p181 = scmp.ne.s32.totalorder %s176, %s178
      %p182 = scmp.eq.s32.totalorder %s29, 0
      %p183 = por %p181, %p182
      %p184 = scmp.ne.s32.totalorder %s176, %s178
      %p185 = scmp.eq.s32.totalorder %s34, 3
      %p186 = por %p184, %p185
      %p187 = scmp.ne.s32.totalorder %s178, %s179
      %p188 = scmp.eq.s32.totalorder %s34, 0
      %p189 = por %p187, %p188
      %p190 = scmp.ne.s32.totalorder %s178, %s179
      %p191 = scmp.eq.s32.totalorder %s35, 3
      %p192 = por %p190, %p191
      %p194 = scmp.ne.s32.totalorder %s179, %s193
      %p195 = scmp.eq.s32.totalorder %s35, 0
      %p196 = por %p194, %p195
      %s198 = sadd.s32 %s197, 1
      %p201 = scmp.eq.s32.totalorder %s29, 3
      %p202 = scmp.ne.s32.totalorder %s197, %s199
      %p203 = scmp.eq.s32.totalorder %s29, 0
      %p204 = por %p202, %p203
      %p205 = scmp.ne.s32.totalorder %s197, %s199
      %p206 = scmp.eq.s32.totalorder %s34, 3
      %p207 = por %p205, %p206
      %p208 = scmp.ne.s32.totalorder %s199, %s200
      %p209 = scmp.eq.s32.totalorder %s34, 0
      %p210 = por %p208, %p209
      %p211 = scmp.ne.s32.totalorder %s199, %s200
      %p212 = scmp.eq.s32.totalorder %s35, 3
      %p213 = por %p211, %p212
      %p215 = scmp.ne.s32.totalorder %s200, %s214
      %p216 = scmp.eq.s32.totalorder %s35, 0
      %p217 = por %p215, %p216
      %s219 = sadd.s32 %s218, 1
      %p222 = scmp.eq.s32.totalorder %s29, 3
      %p223 = scmp.ne.s32.totalorder %s218, %s220
      %p224 = scmp.eq.s32.totalorder %s29, 0
      %p225 = por %p223, %p224
      %p226 = scmp.ne.s32.totalorder %s218, %s220
      %p227 = scmp.eq.s32.totalorder %s34, 3
      %p228 = por %p226, %p227
      %p229 = scmp.ne.s32.totalorder %s220, %s221
      %p230 = scmp.eq.s32.totalorder %s34, 0
      %p231 = por %p229, %p230
      %p232 = scmp.ne.s32.totalorder %s220, %s221
      %p233 = scmp.eq.s32.totalorder %s35, 3
      %p234 = por %p232, %p233
      %p236 = scmp.ne.s32.totalorder %s221, %s235
      %p237 = scmp.eq.s32.totalorder %s35, 0
      %p238 = por %p236, %p237
      %s239 = ssub.s32 %s36, %s48
      %s240 = ssub.s32 %s37, %s44
      %s241 = sor.u32 %s239, %s240
      %p242 = scmp.eq.s32.totalorder %s241, 0
      %s244 = sadd.s32 %s243, 1
      %s245 = scalar_select %p242, %s243, %s244
      %p248 = pneg %p242
      %p249 = scmp.eq.s32.totalorder %s29, 3
      %p250 = por %p248, %p249
      %p251 = scmp.ne.s32.totalorder %s243, %s246
      %p252 = scmp.eq.s32.totalorder %s29, 0
      %p253 = por %p251, %p252
      %p254 = scmp.ne.s32.totalorder %s243, %s246
      %p255 = scmp.eq.s32.totalorder %s34, 3
      %p256 = por %p254, %p255
      %p257 = scmp.ne.s32.totalorder %s246, %s247
      %p258 = scmp.eq.s32.totalorder %s34, 0
      %p259 = por %p257, %p258
      %p260 = scmp.ne.s32.totalorder %s246, %s247
      %p261 = scmp.eq.s32.totalorder %s35, 3
      %p262 = por %p260, %p261
      %p264 = scmp.ne.s32.totalorder %s247, %s263
      %p265 = scmp.eq.s32.totalorder %s35, 0
      %p266 = por %p264, %p265
      %s267 = ssub.s32 %s36, %s48
      %p268 = scmp.eq.s32.totalorder %s267, 0
      %s270 = sadd.s32 %s269, 1
      %s271 = scalar_select %p268, %s269, %s270
      %p274 = pneg %p268
      %p275 = scmp.eq.s32.totalorder %s29, 3
      %p276 = por %p274, %p275
      %p277 = scmp.ne.s32.totalorder %s269, %s272
      %p278 = scmp.eq.s32.totalorder %s29, 0
      %p279 = por %p277, %p278
      %p280 = scmp.ne.s32.totalorder %s269, %s272
      %p281 = scmp.eq.s32.totalorder %s34, 3
      %p282 = por %p280, %p281
      %p283 = scmp.ne.s32.totalorder %s272, %s273
      %p284 = scmp.eq.s32.totalorder %s34, 0
      %p285 = por %p283, %p284
      %p286 = scmp.ne.s32.totalorder %s272, %s273
      %p287 = scmp.eq.s32.totalorder %s35, 3
      %p288 = por %p286, %p287
      %p290 = scmp.ne.s32.totalorder %s273, %s289
      %p291 = scmp.eq.s32.totalorder %s35, 0
      %p292 = por %p290, %p291
      %p293 = scmp.le.s32.totalorder 1, %s29
      %p294 = scmp.lt.s32.totalorder %s29, 5
      %p295 = pnand %p293, %p294
      %p296 = pneg %p295
      // Predicated region
      $region9: #{tpu_custom_call.1} parent=5 // pred_check
        _
      $region10: #{tpu_custom_call.1} parent=5 // pred_check_branch
        %298 = sbr.rel (%p295) target = $region12
      $region11: #{tpu_custom_call.1} parent=5 // pred_region
        %s299 = ssub.s32 %s29, 1
        // Predicated region
        $region13: #{tpu_custom_call.1} parent=11 // pred_check
          %p300 = pneg %p62
        $region14: #{tpu_custom_call.1} parent=11 // pred_check_branch
          %302 = sbr.rel (%p300) target = $region16
        $region15: #{tpu_custom_call.1} parent=11 // pred_region
          %s304 = ssub.s32 16, 16
          %305 = vsyncadd [#allocation5], %s304
          %s307 = sshll.u32 %s0, 4
          %s308 = int_to_ptr.vmem [resolvable:$true] %s307
          %310 = dma.vmem_to_smem %s308, 16, [#allocation2], [#allocation5]
        $region16: #{tpu_custom_call.1} parent=11 // pred_fallthru
          _
        // Predicated region
        $region17: #{tpu_custom_call.1} parent=11 // pred_check
          %p311 = pneg %p189
        $region18: #{tpu_custom_call.1} parent=11 // pred_check_branch
          %313 = sbr.rel (%p311) target = $region20
        $region19: #{tpu_custom_call.1} parent=11 // pred_region
          %s315 = ssub.s32 256, 256
          %316 = vsyncadd [#allocation8], %s315
          %s317 = sshll.u32 [#allocation9], 4
          %s318 = int_to_ptr.vmem [resolvable:$true] %s317
          %323 = dma.hbm_to_vmem [thread:$0]  %s5, 256, %s318, [#allocation8], 128, 128, 8
        $region20: #{tpu_custom_call.1} parent=11 // pred_fallthru
          _
        // Predicated region
        $region21: #{tpu_custom_call.1} parent=11 // pred_check
          %p324 = pneg %p210
        $region22: #{tpu_custom_call.1} parent=11 // pred_check_branch
          %326 = sbr.rel (%p324) target = $region24
        $region23: #{tpu_custom_call.1} parent=11 // pred_region
          _
        $region24: #{tpu_custom_call.1} parent=11 // pred_fallthru
          _
        // Predicated region
        $region25: #{tpu_custom_call.1} parent=11 // pred_check
          %p327 = pneg %p231
        $region26: #{tpu_custom_call.1} parent=11 // pred_check_branch
          %329 = sbr.rel (%p327) target = $region28
        $region27: #{tpu_custom_call.1} parent=11 // pred_region
          _
        $region28: #{tpu_custom_call.1} parent=11 // pred_fallthru
          _
      $region12: #{tpu_custom_call.1} parent=5 // pred_fallthru
        _
      %p330 = scmp.lt.s32.totalorder %s29, 4
      // Predicated region
      $region29: #{tpu_custom_call.1} parent=5 // pred_check
        %p331 = pneg %p330
      $region30: #{tpu_custom_call.1} parent=5 // pred_check_branch
        %333 = sbr.rel (%p331) target = $region32
      $region31: #{tpu_custom_call.1} parent=5 // pred_region
        // Predicated region
        $region33: #{tpu_custom_call.1} parent=31 // pred_check
          %p334 = pneg %p84
        $region34: #{tpu_custom_call.1} parent=31 // pred_check_branch
          %336 = sbr.rel (%p334) target = $region36
        $region35: #{tpu_custom_call.1} parent=31 // pred_region
          %s337 = sand.u32 %s74, 1
          %s338 = scalar_lea.sflag [#allocation3], %s337
          %s339 = sand.u32 %s74, 1
          %s340 = smul.addr %s339, 64
          %s341 = scalar_lea.vmem [#allocation6], %s340
          %s343 = ssub.s32 1024, 1024
          %344 = vsyncadd %s338, %s343
          %s345 = smul.addr %s36, 16
          %s346 = sadd.s32 %s37, %s345
          %s347 = smul.addr %s346, 128
          %s348 = scalar_lea.hbm %s1, %s347
          %s349 = sshll.u32 %s341, 4
          %s350 = int_to_ptr.vmem [resolvable:$true] %s349
          %355 = dma.hbm_to_vmem [thread:$0]  %s348, 1024, %s350, %s338, 256, 128, 8
        $region36: #{tpu_custom_call.1} parent=31 // pred_fallthru
          _
        // Predicated region
        $region37: #{tpu_custom_call.1} parent=31 // pred_check
          %p356 = pneg %p110
        $region38: #{tpu_custom_call.1} parent=31 // pred_check_branch
          %358 = sbr.rel (%p356) target = $region40
        $region39: #{tpu_custom_call.1} parent=31 // pred_region
          %p359 = scmp.lt.s32.totalorder %s36, 1
          %s360 = scalar_select %p359, %s36, 1
          %s361 = smul.addr %s360, 8
          %s362 = smul.addr %s361, 8
          %s363 = scalar_lea.vmem %s2, %s362
        $region40: #{tpu_custom_call.1} parent=31 // pred_fallthru
          _
        // Predicated region
        $region41: #{tpu_custom_call.1} parent=31 // pred_check
          %p364 = pneg %p136
        $region42: #{tpu_custom_call.1} parent=31 // pred_check_branch
          %366 = sbr.rel (%p364) target = $region44
        $region43: #{tpu_custom_call.1} parent=31 // pred_region
          %p367 = scmp.lt.s32.totalorder %s36, 1
          %s368 = scalar_select %p367, %s36, 1
          %s369 = smul.addr %s368, 8
          %s370 = smul.addr %s369, 8
          %s371 = scalar_lea.vmem %s3, %s370
        $region44: #{tpu_custom_call.1} parent=31 // pred_fallthru
          _
        // Predicated region
        $region45: #{tpu_custom_call.1} parent=31 // pred_check
          %p372 = pneg %p162
        $region46: #{tpu_custom_call.1} parent=31 // pred_check_branch
          %374 = sbr.rel (%p372) target = $region48
        $region47: #{tpu_custom_call.1} parent=31 // pred_region
          %s375 = sand.u32 %s29, 1
          %s376 = scalar_lea.sflag [#allocation8], %s375
          %s377 = sand.u32 %s152, 1
          %s378 = smul.addr %s377, 16
          %s379 = scalar_lea.vmem [#allocation7], %s378
          %s381 = ssub.s32 256, 256
          %382 = vsyncadd %s376, %s381
          %s383 = smul.addr %s37, 128
          %s384 = scalar_lea.hbm %s4, %s383
          %s385 = sshll.u32 %s379, 4
          %s386 = int_to_ptr.vmem [resolvable:$true] %s385
          %391 = dma.hbm_to_vmem [thread:$0]  %s384, 256, %s386, %s376, 256, 128, 8
        $region48: #{tpu_custom_call.1} parent=31 // pred_fallthru
          _
      $region32: #{tpu_custom_call.1} parent=5 // pred_fallthru
        _
      %p392 = scmp.le.s32.totalorder 1, %s29
      %p393 = scmp.lt.s32.totalorder %s29, 5
      %p394 = pnand %p392, %p393
      %p395 = pneg %p394
      // Predicated region
      $region49: #{tpu_custom_call.1} parent=5 // pred_check
        _
      $region50: #{tpu_custom_call.1} parent=5 // pred_check_branch
        %397 = sbr.rel (%p394) target = $region52
      $region51: #{tpu_custom_call.1} parent=5 // pred_region
        %s398 = ssub.s32 %s29, 1
        // Predicated region
        $region53: #{tpu_custom_call.1} parent=51 // pred_check
          %p399 = pneg %p62
        $region54: #{tpu_custom_call.1} parent=51 // pred_check_branch
          %401 = sbr.rel (%p399) target = $region56
        $region55: #{tpu_custom_call.1} parent=51 // pred_region
          %402 = dma.done [#allocation5], 16
        $region56: #{tpu_custom_call.1} parent=51 // pred_fallthru
          _
        %s403 = sand.u32 %s77, 1
        %s404 = scalar_lea.sflag [#allocation3], %s403
        %s405 = sand.u32 %s77, 1
        %s406 = smul.addr %s405, 64
        %s407 = scalar_lea.vmem [#allocation6], %s406
        // Predicated region
        $region57: #{tpu_custom_call.1} parent=51 // pred_check
          %p408 = pneg %p90
        $region58: #{tpu_custom_call.1} parent=51 // pred_check_branch
          %410 = sbr.rel (%p408) target = $region60
        $region59: #{tpu_custom_call.1} parent=51 // pred_region
          %411 = dma.done %s404, 1024
        $region60: #{tpu_custom_call.1} parent=51 // pred_fallthru
          _
        %s412 = sand.u32 %s34, 1
        %s413 = scalar_lea.sflag [#allocation8], %s412
        %s414 = sand.u32 %s155, 1
        %s415 = smul.addr %s414, 16
        %s416 = scalar_lea.vmem [#allocation7], %s415
        // Predicated region
        $region61: #{tpu_custom_call.1} parent=51 // pred_check
          %p417 = pneg %p168
        $region62: #{tpu_custom_call.1} parent=51 // pred_check_branch
          %419 = sbr.rel (%p417) target = $region64
        $region63: #{tpu_custom_call.1} parent=51 // pred_region
          %420 = dma.done %s413, 256
        $region64: #{tpu_custom_call.1} parent=51 // pred_fallthru
          _
        // Predicated region
        $region65: #{tpu_custom_call.1} parent=51 // pred_check
          %p421 = pneg %p189
        $region66: #{tpu_custom_call.1} parent=51 // pred_check_branch
          %423 = sbr.rel (%p421) target = $region68
        $region67: #{tpu_custom_call.1} parent=51 // pred_region
          %424 = dma.done [#allocation8], 256
        $region68: #{tpu_custom_call.1} parent=51 // pred_fallthru
          _
        %425 = sfence
        %p426 = pneg %p62
        %p427 = pneg %p59
        %s428 = sand.u32 %s77, 1
        %s429 = scalar_lea.sflag [#allocation3], %s428
        %s430 = sand.u32 %s77, 1
        %s431 = smul.addr %s430, 64
        %s432 = scalar_lea.vmem [#allocation6], %s431
        %p433 = pneg %p90
        %p434 = pneg %p87
        %p435 = scmp.lt.s32.totalorder %s38, 1
        %s436 = scalar_select %p435, %s38, 1
        %s437 = smul.addr %s436, 8
        %s438 = smul.addr %s437, 8
        %s439 = scalar_lea.vmem %s2, %s438
        %p440 = pneg %p116
        %p441 = pneg %p113
        %p442 = scmp.lt.s32.totalorder %s38, 1
        %s443 = scalar_select %p442, %s38, 1
        %s444 = smul.addr %s443, 8
        %s445 = smul.addr %s444, 8
        %s446 = scalar_lea.vmem %s3, %s445
        %p447 = pneg %p142
        %p448 = pneg %p139
        %s449 = sand.u32 %s34, 1
        %s450 = scalar_lea.sflag [#allocation8], %s449
        %s451 = sand.u32 %s155, 1
        %s452 = smul.addr %s451, 16
        %s453 = scalar_lea.vmem [#allocation7], %s452
        %p454 = pneg %p168
        %p455 = pneg %p165
        %p456 = pneg %p189
        %p457 = pneg %p186
        %p458 = pneg %p210
        %p459 = pneg %p207
        %p460 = pneg %p231
        %p461 = pneg %p228
        %p462 = pneg %p259
        %p463 = pneg %p256
        %s464 = sand.u32 %s246, 1
        %s465 = scalar_lea.sflag [#allocation4], %s464
        %s466 = sand.u32 %s246, 1
        %s467 = smul.addr %s466, 64
        %s468 = scalar_lea.vmem [#allocation10], %s467
        %p469 = pneg %p285
        %p470 = pneg %p282
        %s471 = sand.u32 %s272, 1
        %s472 = scalar_lea.sflag [#allocation12], %s471
        %s473 = sand.u32 %s272, 1
        %s474 = smul.addr %s473, 64
        %s475 = scalar_lea.vmem [#allocation11], %s474
        %p476 = scmp.lt.s32.totalorder %s38, 1
        %s477 = scalar_select %p476, %s38, 1
        %s478 = smul.addr %s477, 8
        %s479 = smul.addr %s478, 8
        %s480 = scalar_lea.vmem %s2, %s479
        %p481 = scmp.lt.s32.totalorder %s38, 1
        %s482 = scalar_select %p481, %s38, 1
        %s483 = smul.addr %s482, 8
        %s484 = smul.addr %s483, 8
        %s485 = scalar_lea.vmem %s3, %s484
        %v486 = vld [vmem:[%s6] sm:$0xff]
        %v487 = vld [vmem:[%s6 + $0x8] sm:$0xff]
        %v488 = vld [vmem:[%s6 + $0x10] sm:$0xff]
        %v489 = vld [vmem:[%s6 + $0x18] sm:$0xff]
        %v490 = vld [vmem:[%s6 + $0x20] sm:$0xff]
        %v491 = vld [vmem:[%s6 + $0x28] sm:$0xff]
        %v492 = vld [vmem:[%s6 + $0x30] sm:$0xff]
        %v493 = vld [vmem:[%s6 + $0x38] sm:$0xff]
        %v494 = vld [vmem:[%s485] sm:$0xff]
        %v495 = vld [vmem:[%s485 + $0x8] sm:$0xff]
        %v496 = vld [vmem:[%s485 + $0x10] sm:$0xff]
        %v497 = vld [vmem:[%s485 + $0x18] sm:$0xff]
        %v498 = vld [vmem:[%s485 + $0x20] sm:$0xff]
        %v499 = vld [vmem:[%s485 + $0x28] sm:$0xff]
        %v500 = vld [vmem:[%s485 + $0x30] sm:$0xff]
        %v501 = vld [vmem:[%s485 + $0x38] sm:$0xff]
        %vm502 = vcmask 523264
        %v504 = vsel %vm502, %v486, 0
        %v507 = vsel %vm502, %v487, 0
        %v510 = vsel %vm502, %v488, 0
        %v513 = vsel %vm502, %v489, 0
        %v516 = vsel %vm502, %v490, 0
        %v519 = vsel %vm502, %v491, 0
        %v522 = vsel %vm502, %v492, 0
        %v525 = vsel %vm502, %v493, 0
        %527 = vmatprep.subr.mxu0 0.0
        %528 = vmatpush1.msra.mxu0 0.0
        %529 = vmatprep.subr.mxu0 0.0
        %530 = vmatpush1.msra.mxu0 0.0
        %531 = vmatprep.subr.mxu0 0.0
        %532 = vmatpush1.msra.mxu0 0.0
        %533 = vmatprep.subr.mxu0 0.0
        %534 = vmatpush1.msra.mxu0 0.0
        %535 = vmatprep.subr.mxu0 0.0
        %536 = vmatpush1.msra.mxu0 0.0
        %537 = vmatprep.subr.mxu0 0.0
        %538 = vmatpush1.msra.mxu0 0.0
        %539 = vmatprep.subr.mxu0 0.0
        %540 = vmatpush1.msra.mxu0 0.0
        %541 = vmatprep.subr.mxu0 0.0
        %542 = vmatpush1.msra.mxu0 0.0
        %543 = vmatprep.subr.mxu0 0.0
        %544 = vmatpush1.msra.mxu0 %v501
        %545 = vmatprep.subr.mxu0 0.0
        %546 = vmatpush1.msra.mxu0 %v500
        %547 = vmatprep.subr.mxu0 0.0
        %548 = vmatpush1.msra.mxu0 %v499
        %549 = vmatprep.subr.mxu0 0.0
        %550 = vmatpush1.msra.mxu0 %v498
        %551 = vmatprep.subr.mxu0 0.0
        %552 = vmatpush1.msra.mxu0 %v497
        %553 = vmatprep.subr.mxu0 0.0
        %554 = vmatpush1.msra.mxu0 %v496
        %555 = vmatprep.subr.mxu0 0.0
        %556 = vmatpush1.msra.mxu0 %v495
        %557 = vmatprep.subr.mxu0 0.0
        %558 = vmatpush1.msra.mxu0 %v494
        %559 = vmatprep.subr.mxu0 0.0
        %560 = vmatpush2.msra.mxu0 0.0
        %561 = vmatprep.subr.mxu0 0.0
        %562 = vmatpush2.msra.mxu0 0.0
        %563 = vmatprep.subr.mxu0 0.0
        %564 = vmatpush2.msra.mxu0 0.0
        %565 = vmatprep.subr.mxu0 0.0
        %566 = vmatpush2.msra.mxu0 0.0
        %567 = vmatprep.subr.mxu0 0.0
        %568 = vmatpush2.msra.mxu0 0.0
        %569 = vmatprep.subr.mxu0 0.0
        %570 = vmatpush2.msra.mxu0 0.0
        %571 = vmatprep.subr.mxu0 0.0
        %572 = vmatpush2.msra.mxu0 0.0
        %573 = vmatprep.subr.mxu0 0.0
        %574 = vmatpush2.msra.mxu0 0.0
        %575 = vmatprep.subr.mxu0 0.0
        %576 = vmatpush2.msra.mxu0 0.0
        %577 = vmatprep.subr.mxu0 0.0
        %578 = vmatpush2.msra.mxu0 0.0
        %579 = vmatprep.subr.mxu0 0.0
        %580 = vmatpush2.msra.mxu0 0.0
        %581 = vmatprep.subr.mxu0 0.0
        %582 = vmatpush2.msra.mxu0 0.0
        %583 = vmatprep.subr.mxu0 0.0
        %584 = vmatpush2.msra.mxu0 0.0
        %585 = vmatprep.subr.mxu0 0.0
        %586 = vmatpush2.msra.mxu0 0.0
        %587 = vmatprep.subr.mxu0 0.0
        %588 = vmatpush2.msra.mxu0 0.0
        %589 = vmatprep.subr.mxu0 0.0
        %590 = vmatpush2.msra.mxu0 0.0
        %591 = vmatprep.mubr.f32.mxu0 0.0
        %592 = vmatmul.mubr.f32.gmra.mxu0 %v504
        %v593 = vpop.f32.mrf.mxu0
        %v594 = vadd.f32 0.0, %v593
        %v595 = vpop.f32.mrf.mxu0
        %596 = vmatprep.mubr.f32.mxu0 0.0
        %597 = vmatmul.mubr.f32.gmra.mxu0 %v507
        %v598 = vpop.f32.mrf.mxu0
        %v599 = vadd.f32 0.0, %v598
        %v600 = vpop.f32.mrf.mxu0
        %601 = vmatprep.mubr.f32.mxu0 0.0
        %602 = vmatmul.mubr.f32.gmra.mxu0 %v510
        %v603 = vpop.f32.mrf.mxu0
        %v604 = vadd.f32 0.0, %v603
        %v605 = vpop.f32.mrf.mxu0
        %606 = vmatprep.mubr.f32.mxu0 0.0
        %607 = vmatmul.mubr.f32.gmra.mxu0 %v513
        %v608 = vpop.f32.mrf.mxu0
        %v609 = vadd.f32 0.0, %v608
        %v610 = vpop.f32.mrf.mxu0
        %611 = vmatprep.mubr.f32.mxu0 0.0
        %612 = vmatmul.mubr.f32.gmra.mxu0 %v516
        %v613 = vpop.f32.mrf.mxu0
        %v614 = vadd.f32 0.0, %v613
        %v615 = vpop.f32.mrf.mxu0
        %616 = vmatprep.mubr.f32.mxu0 0.0
        %617 = vmatmul.mubr.f32.gmra.mxu0 %v519
        %v618 = vpop.f32.mrf.mxu0
        %v619 = vadd.f32 0.0, %v618
        %v620 = vpop.f32.mrf.mxu0
        %621 = vmatprep.mubr.f32.mxu0 0.0
        %622 = vmatmul.mubr.f32.gmra.mxu0 %v522
        %v623 = vpop.f32.mrf.mxu0
        %v624 = vadd.f32 0.0, %v623
        %v625 = vpop.f32.mrf.mxu0
        %626 = vmatprep.mubr.f32.mxu0 0.0
        %627 = vmatmul.mubr.f32.gmra.mxu0 %v525
        %v628 = vpop.f32.mrf.mxu0
        %v629 = vadd.f32 0.0, %v628
        %v630 = vpop.f32.mrf.mxu0
        %631 = vdwg.mxu0
        %v632 = vld [vmem:[%s7] sm:$0xff]
        %v633 = vld [vmem:[%s7 + $0x8] sm:$0xff]
        %v634 = vld [vmem:[%s7 + $0x10] sm:$0xff]
        %v635 = vld [vmem:[%s7 + $0x18] sm:$0xff]
        %v636 = vld [vmem:[%s7 + $0x20] sm:$0xff]
        %v637 = vld [vmem:[%s7 + $0x28] sm:$0xff]
        %v638 = vld [vmem:[%s7 + $0x30] sm:$0xff]
        %v639 = vld [vmem:[%s7 + $0x38] sm:$0xff]
        %v640 = vld [vmem:[%s416] sm:$0xff]
        %v641 = vld [vmem:[%s416 + $0x8] sm:$0xff]
        %s642 = sld [smem:[#allocation2]]
        %644 = vset.pattern.permute.xlu0 0
        %645 = vperm.xlu0 %644, %v632
        %v646 = vpop.permute.xlu0 %645
        %649 = vset.pattern.permute.xlu0 0
        %650 = vperm.xlu0 %649, %v633
        %v651 = vpop.permute.xlu0 %650
        %654 = vset.pattern.permute.xlu0 0
        %655 = vperm.xlu0 %654, %v634
        %v656 = vpop.permute.xlu0 %655
        %659 = vset.pattern.permute.xlu0 0
        %660 = vperm.xlu0 %659, %v635
        %v661 = vpop.permute.xlu0 %660
        %vm663 = vcmask 130048
        %v665 = vsel %vm663, %v594, 0
        %v668 = vsel %vm663, %v599, 0
        %v671 = vsel %vm663, %v604, 0
        %v674 = vsel %vm663, %v609, 0
        %676 = vmatprep.subr.mxu0 0.0
        %677 = vmatpush1.msra.mxu0 0.0
        %678 = vmatprep.subr.mxu0 0.0
        %679 = vmatpush1.msra.mxu0 0.0
        %680 = vmatprep.subr.mxu0 0.0
        %681 = vmatpush1.msra.mxu0 0.0
        %682 = vmatprep.subr.mxu0 0.0
        %683 = vmatpush1.msra.mxu0 0.0
        %684 = vmatprep.subr.mxu0 0.0
        %685 = vmatpush1.msra.mxu0 0.0
        %686 = vmatprep.subr.mxu0 0.0
        %687 = vmatpush1.msra.mxu0 0.0
        %688 = vmatprep.subr.mxu0 0.0
        %689 = vmatpush1.msra.mxu0 0.0
        %690 = vmatprep.subr.mxu0 0.0
        %691 = vmatpush1.msra.mxu0 0.0
        %692 = vmatprep.subr.mxu0 0.0
        %693 = vmatpush1.msra.mxu0 0.0
        %694 = vmatprep.subr.mxu0 0.0
        %695 = vmatpush1.msra.mxu0 0.0
        %696 = vmatprep.subr.mxu0 0.0
        %697 = vmatpush1.msra.mxu0 0.0
        %698 = vmatprep.subr.mxu0 0.0
        %699 = vmatpush1.msra.mxu0 0.0
        %700 = vmatprep.subr.mxu0 0.0
        %701 = vmatpush1.msra.mxu0 0.0
        %702 = vmatprep.subr.mxu0 0.0
        %703 = vmatpush1.msra.mxu0 0.0
        %704 = vmatprep.subr.mxu0 0.0
        %705 = vmatpush1.msra.mxu0 %v641
        %706 = vmatprep.subr.mxu0 0.0
        %707 = vmatpush1.msra.mxu0 %v640
        %708 = vmatprep.subr.mxu0 0.0
        %709 = vmatpush2.msra.mxu0 0.0
        %710 = vmatprep.subr.mxu0 0.0
        %711 = vmatpush2.msra.mxu0 0.0
        %712 = vmatprep.subr.mxu0 0.0
        %713 = vmatpush2.msra.mxu0 0.0
        %714 = vmatprep.subr.mxu0 0.0
        %715 = vmatpush2.msra.mxu0 0.0
        %716 = vmatprep.subr.mxu0 0.0
        %717 = vmatpush2.msra.mxu0 0.0
        %718 = vmatprep.subr.mxu0 0.0
        %719 = vmatpush2.msra.mxu0 0.0
        %720 = vmatprep.subr.mxu0 0.0
        %721 = vmatpush2.msra.mxu0 0.0
        %722 = vmatprep.subr.mxu0 0.0
        %723 = vmatpush2.msra.mxu0 0.0
        %724 = vmatprep.subr.mxu0 0.0
        %725 = vmatpush2.msra.mxu0 0.0
        %726 = vmatprep.subr.mxu0 0.0
        %727 = vmatpush2.msra.mxu0 0.0
        %728 = vmatprep.subr.mxu0 0.0
        %729 = vmatpush2.msra.mxu0 0.0
        %730 = vmatprep.subr.mxu0 0.0
        %731 = vmatpush2.msra.mxu0 0.0
        %732 = vmatprep.subr.mxu0 0.0
        %733 = vmatpush2.msra.mxu0 0.0
        %734 = vmatprep.subr.mxu0 0.0
        %735 = vmatpush2.msra.mxu0 0.0
        %736 = vmatprep.subr.mxu0 0.0
        %737 = vmatpush2.msra.mxu0 0.0
        %738 = vmatprep.subr.mxu0 0.0
        %739 = vmatpush2.msra.mxu0 0.0
        %740 = vmatprep.mubr.f32.mxu0 0.0
        %741 = vmatmul.mubr.f32.gmra.mxu0 %v665
        %v742 = vpop.f32.mrf.mxu0
        %v743 = vadd.f32 %v646, %v742
        %v744 = vpop.f32.mrf.mxu0
        %745 = vmatprep.mubr.f32.mxu0 0.0
        %746 = vmatmul.mubr.f32.gmra.mxu0 %v668
        %v747 = vpop.f32.mrf.mxu0
        %v748 = vadd.f32 %v651, %v747
        %v749 = vpop.f32.mrf.mxu0
        %750 = vmatprep.mubr.f32.mxu0 0.0
        %751 = vmatmul.mubr.f32.gmra.mxu0 %v671
        %v752 = vpop.f32.mrf.mxu0
        %v753 = vadd.f32 %v656, %v752
        %v754 = vpop.f32.mrf.mxu0
        %755 = vmatprep.mubr.f32.mxu0 0.0
        %756 = vmatmul.mubr.f32.gmra.mxu0 %v674
        %v757 = vpop.f32.mrf.mxu0
        %v758 = vadd.f32 %v661, %v757
        %v759 = vpop.f32.mrf.mxu0
        %760 = vdwg.mxu0
        %v761 = vmax.f32 %v743, 0.0
        %v762 = vmax.f32 %v748, 0.0
        %v763 = vmax.f32 %v753, 0.0
        %v764 = vmax.f32 %v758, 0.0
        %765 = vset.pattern.permute.xlu0 1
        %766 = vperm.xlu0 %765, %v632
        %v767 = vpop.permute.xlu0 %766
        %769 = vset.pattern.permute.xlu0 1
        %770 = vperm.xlu0 %769, %v633
        %v771 = vpop.permute.xlu0 %770
        %773 = vset.pattern.permute.xlu0 1
        %774 = vperm.xlu0 %773, %v634
        %v775 = vpop.permute.xlu0 %774
        %777 = vset.pattern.permute.xlu0 1
        %778 = vperm.xlu0 %777, %v635
        %v779 = vpop.permute.xlu0 %778
        %v781 = vmul.f32 %v767, %v761
        %v782 = vmul.f32 %v771, %v762
        %v783 = vmul.f32 %v775, %v763
        %v784 = vmul.f32 %v779, %v764
        %v785 = vadd.f32 %v781, %v782
        %v786 = vadd.f32 %v785, %v783
        %v787 = vadd.f32 %v786, %v784
        %v788 = vrot.slane %v787, 4
        %v789 = vadd.f32 %v787, %v788
        %v790 = vrot.slane %v789, 2
        %v791 = vadd.f32 %v789, %v790
        %v792 = vrot.slane %v791, 1
        %v793 = vadd.f32 %v791, %v792
        %v794 = vstv %s642
        %v795 = vadd.f32 %v793, %v794
        %v796 = vxor.u32 %v795, 2147483648
        %v797 = vmul.f32 %v796, 1.442695
        %v798 = vpow.pop %v797
        %v799 = vadd.f32 %v798, 1.0
        %v800 = vrcp.pop %v799
        %v801 = vmul.f32 1.0, %v800
        %v802 = vld [vmem:[%s407] sm:$0xff]
        %v803 = vld [vmem:[%s407 + $0x8] sm:$0xff]
        %v804 = vld [vmem:[%s407 + $0x10] sm:$0xff]
        %v805 = vld [vmem:[%s407 + $0x18] sm:$0xff]
        %v806 = vld [vmem:[%s407 + $0x20] sm:$0xff]
        %v807 = vld [vmem:[%s407 + $0x28] sm:$0xff]
        %v808 = vld [vmem:[%s407 + $0x30] sm:$0xff]
        %v809 = vld [vmem:[%s407 + $0x38] sm:$0xff]
        %v810 = vmul.f32 %v802, %v801
        %v811 = vmul.f32 %v803, %v801
        %v812 = vmul.f32 %v804, %v801
        %v813 = vmul.f32 %v805, %v801
        %v814 = vmul.f32 %v806, %v801
        %v815 = vmul.f32 %v807, %v801
        %v816 = vmul.f32 %v808, %v801
        %v817 = vmul.f32 %v809, %v801
        %818 = vst [vmem:[%s468] sm:$0xff] %v810
        %819 = vst [vmem:[%s468 + $0x8] sm:$0xff] %v811
        %820 = vst [vmem:[%s468 + $0x10] sm:$0xff] %v812
        %821 = vst [vmem:[%s468 + $0x18] sm:$0xff] %v813
        %822 = vst [vmem:[%s468 + $0x20] sm:$0xff] %v814
        %823 = vst [vmem:[%s468 + $0x28] sm:$0xff] %v815
        %824 = vst [vmem:[%s468 + $0x30] sm:$0xff] %v816
        %825 = vst [vmem:[%s468 + $0x38] sm:$0xff] %v817
        %p826 = scmp.eq.s32.totalorder %s39, 0
        // Predicated region
        $region69: #{tpu_custom_call.1} parent=51 // pred_check
          %p827 = pneg %p826
        $region70: #{tpu_custom_call.1} parent=51 // pred_check_branch
          %829 = sbr.rel (%p827) target = $region72
        $region71: #{tpu_custom_call.1} parent=51 // pred_region
          %v830 = vld [vmem:[#allocation9] sm:$0xff]
          %v831 = vld [vmem:[#allocation9 + $0x8] sm:$0xff]
          %s832 = sld [smem:[#allocation2 + $0x1]]
          %834 = vset.pattern.permute.xlu0 0
          %835 = vperm.xlu0 %834, %v636
          %v836 = vpop.permute.xlu0 %835
          %839 = vset.pattern.permute.xlu0 0
          %840 = vperm.xlu0 %839, %v637
          %v841 = vpop.permute.xlu0 %840
          %844 = vset.pattern.permute.xlu0 0
          %845 = vperm.xlu0 %844, %v638
          %v846 = vpop.permute.xlu0 %845
          %849 = vset.pattern.permute.xlu0 0
          %850 = vperm.xlu0 %849, %v639
          %v851 = vpop.permute.xlu0 %850
          %v854 = vsel %vm663, %v614, 0
          %v857 = vsel %vm663, %v619, 0
          %v860 = vsel %vm663, %v624, 0
          %v863 = vsel %vm663, %v629, 0
          %865 = vmatprep.subr.mxu0 0.0
          %866 = vmatpush1.msra.mxu0 0.0
          %867 = vmatprep.subr.mxu0 0.0
          %868 = vmatpush1.msra.mxu0 0.0
          %869 = vmatprep.subr.mxu0 0.0
          %870 = vmatpush1.msra.mxu0 0.0
          %871 = vmatprep.subr.mxu0 0.0
          %872 = vmatpush1.msra.mxu0 0.0
          %873 = vmatprep.subr.mxu0 0.0
          %874 = vmatpush1.msra.mxu0 0.0
          %875 = vmatprep.subr.mxu0 0.0
          %876 = vmatpush1.msra.mxu0 0.0
          %877 = vmatprep.subr.mxu0 0.0
          %878 = vmatpush1.msra.mxu0 0.0
          %879 = vmatprep.subr.mxu0 0.0
          %880 = vmatpush1.msra.mxu0 0.0
          %881 = vmatprep.subr.mxu0 0.0
          %882 = vmatpush1.msra.mxu0 0.0
          %883 = vmatprep.subr.mxu0 0.0
          %884 = vmatpush1.msra.mxu0 0.0
          %885 = vmatprep.subr.mxu0 0.0
          %886 = vmatpush1.msra.mxu0 0.0
          %887 = vmatprep.subr.mxu0 0.0
          %888 = vmatpush1.msra.mxu0 0.0
          %889 = vmatprep.subr.mxu0 0.0
          %890 = vmatpush1.msra.mxu0 0.0
          %891 = vmatprep.subr.mxu0 0.0
          %892 = vmatpush1.msra.mxu0 0.0
          %893 = vmatprep.subr.mxu0 0.0
          %894 = vmatpush1.msra.mxu0 %v831
          %895 = vmatprep.subr.mxu0 0.0
          %896 = vmatpush1.msra.mxu0 %v830
          %897 = vmatprep.subr.mxu0 0.0
          %898 = vmatpush2.msra.mxu0 0.0
          %899 = vmatprep.subr.mxu0 0.0
          %900 = vmatpush2.msra.mxu0 0.0
          %901 = vmatprep.subr.mxu0 0.0
          %902 = vmatpush2.msra.mxu0 0.0
          %903 = vmatprep.subr.mxu0 0.0
          %904 = vmatpush2.msra.mxu0 0.0
          %905 = vmatprep.subr.mxu0 0.0
          %906 = vmatpush2.msra.mxu0 0.0
          %907 = vmatprep.subr.mxu0 0.0
          %908 = vmatpush2.msra.mxu0 0.0
          %909 = vmatprep.subr.mxu0 0.0
          %910 = vmatpush2.msra.mxu0 0.0
          %911 = vmatprep.subr.mxu0 0.0
          %912 = vmatpush2.msra.mxu0 0.0
          %913 = vmatprep.subr.mxu0 0.0
          %914 = vmatpush2.msra.mxu0 0.0
          %915 = vmatprep.subr.mxu0 0.0
          %916 = vmatpush2.msra.mxu0 0.0
          %917 = vmatprep.subr.mxu0 0.0
          %918 = vmatpush2.msra.mxu0 0.0
          %919 = vmatprep.subr.mxu0 0.0
          %920 = vmatpush2.msra.mxu0 0.0
          %921 = vmatprep.subr.mxu0 0.0
          %922 = vmatpush2.msra.mxu0 0.0
          %923 = vmatprep.subr.mxu0 0.0
          %924 = vmatpush2.msra.mxu0 0.0
          %925 = vmatprep.subr.mxu0 0.0
          %926 = vmatpush2.msra.mxu0 0.0
          %927 = vmatprep.subr.mxu0 0.0
          %928 = vmatpush2.msra.mxu0 0.0
          %929 = vmatprep.mubr.f32.mxu0 0.0
          %930 = vmatmul.mubr.f32.gmra.mxu0 %v854
          %v931 = vpop.f32.mrf.mxu0
          %v932 = vadd.f32 %v836, %v931
          %v933 = vpop.f32.mrf.mxu0
          %934 = vmatprep.mubr.f32.mxu0 0.0
          %935 = vmatmul.mubr.f32.gmra.mxu0 %v857
          %v936 = vpop.f32.mrf.mxu0
          %v937 = vadd.f32 %v841, %v936
          %v938 = vpop.f32.mrf.mxu0
          %939 = vmatprep.mubr.f32.mxu0 0.0
          %940 = vmatmul.mubr.f32.gmra.mxu0 %v860
          %v941 = vpop.f32.mrf.mxu0
          %v942 = vadd.f32 %v846, %v941
          %v943 = vpop.f32.mrf.mxu0
          %944 = vmatprep.mubr.f32.mxu0 0.0
          %945 = vmatmul.mubr.f32.gmra.mxu0 %v863
          %v946 = vpop.f32.mrf.mxu0
          %v947 = vadd.f32 %v851, %v946
          %v948 = vpop.f32.mrf.mxu0
          %949 = vdwg.mxu0
          %v950 = vmax.f32 %v932, 0.0
          %v951 = vmax.f32 %v937, 0.0
          %v952 = vmax.f32 %v942, 0.0
          %v953 = vmax.f32 %v947, 0.0
          %954 = vset.pattern.permute.xlu0 1
          %955 = vperm.xlu0 %954, %v636
          %v956 = vpop.permute.xlu0 %955
          %958 = vset.pattern.permute.xlu0 1
          %959 = vperm.xlu0 %958, %v637
          %v960 = vpop.permute.xlu0 %959
          %962 = vset.pattern.permute.xlu0 1
          %963 = vperm.xlu0 %962, %v638
          %v964 = vpop.permute.xlu0 %963
          %966 = vset.pattern.permute.xlu0 1
          %967 = vperm.xlu0 %966, %v639
          %v968 = vpop.permute.xlu0 %967
          %v970 = vmul.f32 %v956, %v950
          %v971 = vmul.f32 %v960, %v951
          %v972 = vmul.f32 %v964, %v952
          %v973 = vmul.f32 %v968, %v953
          %v974 = vsel %vm502, %v970, 0.0
          %v975 = vsel %vm502, %v971, 0.0
          %v976 = vadd.f32 %v974, %v975
          %v977 = vsel %vm502, %v972, 0.0
          %v978 = vadd.f32 %v976, %v977
          %v979 = vsel %vm502, %v973, 0.0
          %v980 = vadd.f32 %v978, %v979
          %v981 = vrot.slane %v980, 4
          %v982 = vadd.f32 %v980, %v981
          %v983 = vrot.slane %v982, 2
          %v984 = vadd.f32 %v982, %v983
          %v985 = vrot.slane %v984, 1
          %v986 = vadd.f32 %v984, %v985
          %v987 = vstv %s832
          %v988 = vadd.f32 %v986, %v987
          %v989 = vxor.u32 %v988, 2147483648
          %v990 = vmul.f32 %v989, 1.442695
          %v991 = vpow.pop %v990
          %v992 = vadd.f32 %v991, 1.0
          %v993 = vrcp.pop %v992
          %v994 = vmul.f32 1.0, %v993
          %v995 = vld [vmem:[%s480] sm:$0xff]
          %v996 = vld [vmem:[%s480 + $0x8] sm:$0xff]
          %v997 = vld [vmem:[%s480 + $0x10] sm:$0xff]
          %v998 = vld [vmem:[%s480 + $0x18] sm:$0xff]
          %v999 = vld [vmem:[%s480 + $0x20] sm:$0xff]
          %v1000 = vld [vmem:[%s480 + $0x28] sm:$0xff]
          %v1001 = vld [vmem:[%s480 + $0x30] sm:$0xff]
          %v1002 = vld [vmem:[%s480 + $0x38] sm:$0xff]
          %v1003 = vmul.f32 %v995, %v994
          %v1004 = vmul.f32 %v996, %v994
          %v1005 = vmul.f32 %v997, %v994
          %v1006 = vmul.f32 %v998, %v994
          %v1007 = vmul.f32 %v999, %v994
          %v1008 = vmul.f32 %v1000, %v994
          %v1009 = vmul.f32 %v1001, %v994
          %v1010 = vmul.f32 %v1002, %v994
          %1011 = vst.msk [vmem:[%s475] sm:$0xff] %vm502, %v1003
          %1012 = vst.msk [vmem:[%s475 + $0x8] sm:$0xff] %vm502, %v1004
          %1013 = vst.msk [vmem:[%s475 + $0x10] sm:$0xff] %vm502, %v1005
          %1014 = vst.msk [vmem:[%s475 + $0x18] sm:$0xff] %vm502, %v1006
          %1015 = vst.msk [vmem:[%s475 + $0x20] sm:$0xff] %vm502, %v1007
          %1016 = vst.msk [vmem:[%s475 + $0x28] sm:$0xff] %vm502, %v1008
          %1017 = vst.msk [vmem:[%s475 + $0x30] sm:$0xff] %vm502, %v1009
          %1018 = vst.msk [vmem:[%s475 + $0x38] sm:$0xff] %vm502, %v1010
        $region72: #{tpu_custom_call.1} parent=51 // pred_fallthru
          _
        %s1019 = sand.u32 %s246, 1
        %s1020 = scalar_lea.sflag [#allocation4], %s1019
        %s1021 = sand.u32 %s246, 1
        %s1022 = smul.addr %s1021, 64
        %s1023 = scalar_lea.vmem [#allocation10], %s1022
        %s1024 = sand.u32 %s272, 1
        %s1025 = scalar_lea.sflag [#allocation12], %s1024
        %s1026 = sand.u32 %s272, 1
        %s1027 = smul.addr %s1026, 64
        %s1028 = scalar_lea.vmem [#allocation11], %s1027
        // Predicated region
        $region73: #{tpu_custom_call.1} parent=51 // pred_check
          %p1029 = pneg %p256
        $region74: #{tpu_custom_call.1} parent=51 // pred_check_branch
          %1031 = sbr.rel (%p1029) target = $region76
        $region75: #{tpu_custom_call.1} parent=51 // pred_region
          %s1033 = ssub.s32 1024, 1024
          %1034 = vsyncadd %s1020, %s1033
          %s1035 = smul.addr %s38, 16
          %s1036 = sadd.s32 %s39, %s1035
          %s1037 = smul.addr %s1036, 128
          %s1038 = scalar_lea.hbm %s8, %s1037
          %s1039 = sshll.u32 %s1023, 4
          %s1040 = int_to_ptr.vmem [resolvable:$true] %s1039
          %1045 = dma.vmem_to_hbm [thread:$0]  %s1040, 1024, %s1038, %s1020, 128, 256, 8
        $region76: #{tpu_custom_call.1} parent=51 // pred_fallthru
          _
        // Predicated region
        $region77: #{tpu_custom_call.1} parent=51 // pred_check
          %p1046 = pneg %p282
        $region78: #{tpu_custom_call.1} parent=51 // pred_check_branch
          %1048 = sbr.rel (%p1046) target = $region80
        $region79: #{tpu_custom_call.1} parent=51 // pred_region
          %s1050 = ssub.s32 1024, 1024
          %1051 = vsyncadd %s1025, %s1050
          %s1052 = smul.addr %s38, 8
          %s1053 = smul.addr %s1052, 128
          %s1054 = scalar_lea.hbm %s9, %s1053
          %s1055 = sshll.u32 %s1028, 4
          %s1056 = int_to_ptr.vmem [resolvable:$true] %s1055
          %1061 = dma.vmem_to_hbm [thread:$0]  %s1056, 1024, %s1054, %s1025, 128, 128, 8
        $region80: #{tpu_custom_call.1} parent=51 // pred_fallthru
          _
      $region52: #{tpu_custom_call.1} parent=5 // pred_fallthru
        _
      %p1062 = scmp.le.s32.totalorder 2, %s29
      // Predicated region
      $region81: #{tpu_custom_call.1} parent=5 // pred_check
        %p1063 = pneg %p1062
      $region82: #{tpu_custom_call.1} parent=5 // pred_check_branch
        %1065 = sbr.rel (%p1063) target = $region84
      $region83: #{tpu_custom_call.1} parent=5 // pred_region
        %s1066 = ssub.s32 %s29, 2
        // Predicated region
        $region85: #{tpu_custom_call.1} parent=83 // pred_check
          %p1067 = pneg %p262
        $region86: #{tpu_custom_call.1} parent=83 // pred_check_branch
          %1069 = sbr.rel (%p1067) target = $region88
        $region87: #{tpu_custom_call.1} parent=83 // pred_region
          %s1070 = sand.u32 %s247, 1
          %s1071 = scalar_lea.sflag [#allocation4], %s1070
          %s1072 = sand.u32 %s247, 1
          %s1073 = smul.addr %s1072, 64
          %s1074 = scalar_lea.vmem [#allocation10], %s1073
          %1075 = dma.done %s1071, 1024
        $region88: #{tpu_custom_call.1} parent=83 // pred_fallthru
          _
        // Predicated region
        $region89: #{tpu_custom_call.1} parent=83 // pred_check
          %p1076 = pneg %p288
        $region90: #{tpu_custom_call.1} parent=83 // pred_check_branch
          %1078 = sbr.rel (%p1076) target = $region92
        $region91: #{tpu_custom_call.1} parent=83 // pred_region
          %s1079 = sand.u32 %s273, 1
          %s1080 = scalar_lea.sflag [#allocation12], %s1079
          %s1081 = sand.u32 %s273, 1
          %s1082 = smul.addr %s1081, 64
          %s1083 = scalar_lea.vmem [#allocation11], %s1082
          %1084 = dma.done %s1080, 1024
        $region92: #{tpu_custom_call.1} parent=83 // pred_fallthru
          _
      $region84: #{tpu_custom_call.1} parent=5 // pred_fallthru
        _
    $region6: #{tpu_custom_call.1} parent=1 // loop_footer
      %s33 = sadd.s32 1, %s29
    $region7: #{tpu_custom_call.1} parent=1 // loop_footer_branch
      %28 = sbr.rel target = $region3
    $region8: #{tpu_custom_call.1} parent=1 // loop_exit
      _
    %1085 = vsyncpa [#allocation3], 1
    %s1086 = scalar_lea.sflag [#allocation3], 1
    %1087 = vsyncpa %s1086, 1
    %1088 = vsyncpa [#allocation8], 1
    %s1089 = scalar_lea.sflag [#allocation8], 1
    %1090 = vsyncpa %s1089, 1
    %1091 = vsyncpa [#allocation4], 1
    %s1092 = scalar_lea.sflag [#allocation4], 1
    %1093 = vsyncpa %s1092, 1
    %1094 = vsyncpa [#allocation12], 1
    %s1095 = scalar_lea.sflag [#allocation12], 1
    %1096 = vsyncpa %s1095, 1
    %1097 = vsyncpa [#allocation5], 1
    %s1098 = scalar_lea.sflag [#allocation5], 1
    %1099 = vsyncpa %s1098, 1

</llo_original>
